<compile_context>
chip_gen: v6e
topology: v6e:2x2x1
jax: 0.10.0
libtpu: 0.0.40
codegen_flags: <defaults>
</compile_context>

<pallas_src>
from functools import partial

import jax
import jax.numpy as jnp
from jax.experimental import pallas as pl
from jax.experimental.pallas import tpu as pltpu


def _round_up(x, m):
    return ((x + m - 1) // m) * m


def _default_tiles():
    """Per-generation tile defaults (tm, tn, tk)."""
    try:
        kind = jax.devices()[0].device_kind.lower()
    except Exception:  # pragma: no cover - CPU interpret fallback etc.
        kind = ""
    if "v6" in kind:
        # v6e: 128 MiB VMEM, needs ~700 FLOP/byte -> big 1024 output tiles.
        return 1024, 1024, 512
    # v5e (crossover ~240 FLOP/byte) and v7x (64 MiB VMEM per TC, ~310 FLOP/byte)
    # are both well served by 512 tiles.
    return 512, 512, 512


def _qlora_kernel(x_ref, wt_ref, mid_ref, bt_ref, o_ref, acc_ref):
    # x_ref:   (tm, tk)    bf16 activations tile
    # wt_ref:  (tk, tn)    bf16 frozen base weight tile (pre-transposed)
    # mid_ref: (tm, rpad)  bf16 precomputed LoRA mid = x @ A.T (rank padded)
    # bt_ref:  (rpad, tn)  bf16 LoRA-B tile (pre-transposed, alpha folded in)
    # o_ref:   (tm, tn)    output tile
    # acc_ref: (tm, tn)    f32  frozen-path accumulator (scratch)
    k = pl.program_id(2)

    @pl.when(k == 0)
    def _():
        acc_ref[...] = jnp.zeros_like(acc_ref)

    acc_ref[...] += jnp.dot(x_ref[...], wt_ref[...],
                            preferred_element_type=jnp.float32)

    @pl.when(k == pl.num_programs(2) - 1)
    def _():
        # LoRA correction only once per (i, j) output tile; bf16 x bf16 inputs
        # run at native MXU rate, accumulation stays f32.
        lora = jnp.dot(mid_ref[...], bt_ref[...],
                       preferred_element_type=jnp.float32)
        o_ref[...] = (acc_ref[...] + lora).astype(o_ref.dtype)


@partial(jax.jit,
         static_argnames=("tm", "tn", "tk", "rpad", "out_dim", "out_dtype"))
def _qlora_apply(x2d, wtp, btp, a_bf16, *, tm, tn, tk, rpad, out_dim,
                 out_dtype):
    M, in_dim = x2d.shape
    Kp, Np = wtp.shape
    rank = a_bf16.shape[0]
    Mp = _round_up(M, tm)

    xb = x2d.astype(jnp.bfloat16)
    xp = jnp.zeros((Mp, Kp), jnp.bfloat16).at[:M, :in_dim].set(xb)

    # Tiny LoRA-A matmul (M x rank) hoisted out of the kernel's K loop.
    mid = jnp.dot(xb, a_bf16.T, preferred_element_type=jnp.float32)
    midp = jnp.zeros((Mp, rpad), jnp.bfloat16).at[:M, :rank].set(
        mid.astype(jnp.bfloat16))

    grid = (Mp // tm, Np // tn, Kp // tk)

    out_bytes = jnp.dtype(out_dtype).itemsize
    flops = 2 * M * in_dim * out_dim + 2 * M * in_dim * rank \
        + 2 * M * rpad * out_dim
    bytes_accessed = (xp.size * 2 + wtp.size * 2 + midp.size * 2
                      + btp.size * 2 + Mp * Np * out_bytes)

    # Per-step VMEM: double-buffered inputs/output + f32 accumulator scratch.
    vmem_bytes = 2 * (tm * tk * 2 + tk * tn * 2 + tm * rpad * 2
                      + rpad * tn * 2 + tm * tn * out_bytes) + tm * tn * 4
    vmem_limit = int(min(max(32 << 20, vmem_bytes + (8 << 20)), 56 << 20))

    out_p = pl.pallas_call(
        _qlora_kernel,
        out_shape=jax.ShapeDtypeStruct((Mp, Np), out_dtype),
        grid_spec=pltpu.PrefetchScalarGridSpec(
            num_scalar_prefetch=0,
            grid=grid,
            in_specs=[
                pl.BlockSpec((tm, tk), lambda i, j, k: (i, k)),
                pl.BlockSpec((tk, tn), lambda i, j, k: (k, j)),
                pl.BlockSpec((tm, rpad), lambda i, j, k: (i, 0)),
                pl.BlockSpec((rpad, tn), lambda i, j, k: (0, j)),
            ],
            out_specs=pl.BlockSpec((tm, tn), lambda i, j, k: (i, j)),
            scratch_shapes=[
                pltpu.VMEM((tm, tn), jnp.float32),  # frozen-path accumulator
            ],
        ),
        compiler_params=pltpu.CompilerParams(
            dimension_semantics=("parallel", "parallel", "arbitrary"),
            vmem_limit_bytes=vmem_limit,
        ),
        cost_estimate=pl.CostEstimate(
            flops=int(flops), transcendentals=0,
            bytes_accessed=int(bytes_accessed)),
    )(xp, wtp, midp, btp)

    return out_p[:M, :out_dim]


class QLoRALinearPallas:
    """QLoRALinear forward with frozen-weight prep hoisted to init."""

    def __init__(self, w, a, b, alpha, out_dtype=jnp.bfloat16):
        self.out_dim, self.in_dim = w.shape
        self.rank = a.shape[0]
        self.out_dtype = out_dtype

        tm_d, tn_d, tk_d = _default_tiles()
        self.tm_default = tm_d
        self.tn = min(tn_d, _round_up(self.out_dim, 128))
        self.tk = min(tk_d, _round_up(self.in_dim, 128))
        self.rpad = _round_up(self.rank, 128)
        Np = _round_up(self.out_dim, self.tn)
        Kp = _round_up(self.in_dim, self.tk)

        # One-time frozen-weight prep: transpose, bf16 cast, fold alpha into
        # B, zero-pad to tile multiples (zero padding is exact for matmul).
        self.wtp = jnp.zeros((Kp, Np), jnp.bfloat16).at[
            :self.in_dim, :self.out_dim].set(w.T.astype(jnp.bfloat16))
        self.btp = jnp.zeros((self.rpad, Np), jnp.bfloat16).at[
            :self.rank, :self.out_dim].set(
                (float(alpha) * b.T).astype(jnp.bfloat16))
        self.a_bf16 = a.astype(jnp.bfloat16)

    def __call__(self, x):
        lead = x.shape[:-1]
        x2d = x.reshape(-1, self.in_dim)
        M = x2d.shape[0]
        # Small-M: single i block -> frozen W streams from HBM exactly once.
        tm = min(self.tm_default, _round_up(M, 16))
        out2d = _qlora_apply(
            x2d, self.wtp, self.btp, self.a_bf16,
            tm=tm, tn=self.tn, tk=self.tk, rpad=self.rpad,
            out_dim=self.out_dim, out_dtype=self.out_dtype)
        return out2d.reshape(*lead, self.out_dim)


if __name__ == "__main__":
    # Small shapes consistent with the module: batch=2, seq=8, hidden=32.
    batch, seq = 2, 8
    in_dim, out_dim, rank = 32, 32, 4
    alpha = 8.0

    key = jax.random.PRNGKey(0)
    kx, kw, ka, kb = jax.random.split(key, 4)

    x = jax.random.normal(kx, (batch, seq, in_dim), dtype=jnp.float32)
    # Deterministic parameter init (mimicking nn.Linear's uniform init scale).
    w = jax.random.uniform(kw, (out_dim, in_dim), minval=-1.0, maxval=1.0,
                           dtype=jnp.float32) / jnp.sqrt(in_dim)
    a = jax.random.uniform(ka, (rank, in_dim), minval=-1.0, maxval=1.0,
                           dtype=jnp.float32) / jnp.sqrt(in_dim)
    b = jax.random.uniform(kb, (out_dim, rank), minval=-1.0, maxval=1.0,
                           dtype=jnp.float32) / jnp.sqrt(rank)

    module = QLoRALinearPallas(w, a, b, alpha)
    out = module(x)
    jax.block_until_ready(out)

    # Reference check in plain JAX on the same bf16-rounded operands the
    # kernel consumes (frozen path, LoRA mid, and B all bf16; f32 accum).
    x2d = x.reshape(batch * seq, in_dim)
    xr = x2d.astype(jnp.bfloat16).astype(jnp.float32)
    wr = w.astype(jnp.bfloat16).astype(jnp.float32)
    ar = a.astype(jnp.bfloat16).astype(jnp.float32)
    btr = (alpha * b.T).astype(jnp.bfloat16).astype(jnp.float32)
    midr = (xr @ ar.T).astype(jnp.bfloat16).astype(jnp.float32)
    ref = (xr @ wr.T + midr @ btr).reshape(batch, seq, out_dim)

    out_f32 = out.astype(jnp.float32)
    assert out.shape == (batch, seq, out_dim)
    assert jnp.allclose(out_f32, ref, atol=5e-2, rtol=5e-2), \
        "mismatch vs reference"

    print("KERNEL_OK")
</pallas_src>

<mosaic_0001>
module attributes {stable_mosaic.version = 11 : i64} {
  func.func @_qlora_kernel(%arg0: i32, %arg1: i32, %arg2: i32, %arg3: memref<16x128xbf16, #tpu.memory_space<vmem>>, %arg4: memref<128x128xbf16, #tpu.memory_space<vmem>>, %arg5: memref<16x128xbf16, #tpu.memory_space<vmem>>, %arg6: memref<128x128xbf16, #tpu.memory_space<vmem>>, %arg7: memref<16x128xbf16, #tpu.memory_space<vmem>>, %arg8: memref<16x128xf32, #tpu.memory_space<vmem>>) attributes {dimension_semantics = [#tpu.dimension_semantics<parallel>, #tpu.dimension_semantics<parallel>, #tpu.dimension_semantics<arbitrary>], iteration_bounds = array<i64: 1, 1, 1>, scalar_prefetch = 0 : i64, scratch_operands = 1 : i64, tpu.core_type = #tpu.core_type<tc>, window_params = [{transform_indices = @transform_0, window_bounds = array<i64: 16, 128>}, {transform_indices = @transform_1, window_bounds = array<i64: 128, 128>}, {transform_indices = @transform_2, window_bounds = array<i64: 16, 128>}, {transform_indices = @transform_3, window_bounds = array<i64: 128, 128>}, {transform_indices = @transform_4, window_bounds = array<i64: 16, 128>}]} {
    %c0_i32 = arith.constant 0 : i32
    %0 = arith.cmpi eq, %arg2, %c0_i32 : i32
    %1 = arith.extui %0 : i1 to i32
    %c0_i32_0 = arith.constant 0 : i32
    %2 = arith.cmpi ne, %1, %c0_i32_0 : i32
    scf.if %2 {
      %cst_10 = arith.constant 0.000000e+00 : f32
      %12 = vector.broadcast %cst_10 : f32 to vector<16x128xf32>
      %c0_11 = arith.constant 0 : index
      %c0_12 = arith.constant 0 : index
      %13 = vector.load %arg8[%c0_11, %c0_12] : memref<16x128xf32, #tpu.memory_space<vmem>>, vector<16x128xf32>
      tpu.vector_store %arg8[%c0_11, %c0_12], %12 {strides = array<i32>} : memref<16x128xf32, #tpu.memory_space<vmem>>, vector<16x128xf32>,
    } else {
    }
    %c0 = arith.constant 0 : index
    %c0_1 = arith.constant 0 : index
    %3 = vector.load %arg8[%c0, %c0_1] : memref<16x128xf32, #tpu.memory_space<vmem>>, vector<16x128xf32>
    %c0_2 = arith.constant 0 : index
    %c0_3 = arith.constant 0 : index
    %4 = vector.load %arg3[%c0_2, %c0_3] : memref<16x128xbf16, #tpu.memory_space<vmem>>, vector<16x128xbf16>
    %c0_4 = arith.constant 0 : index
    %c0_5 = arith.constant 0 : index
    %5 = vector.load %arg4[%c0_4, %c0_5] : memref<128x128xbf16, #tpu.memory_space<vmem>>, vector<128x128xbf16>
    %cst = arith.constant dense<0.000000e+00> : vector<16x128xf32>
    %6 = tpu.matmul %4, %5, %cst {dimension_numbers = #tpu.dot_dimension_numbers<[1], [0], [0], [1], [0, 0, 1, 1], [], []>} : vector<16x128xbf16>, vector<128x128xbf16>, vector<16x128xf32> -> vector<16x128xf32>
    %7 = arith.addf %3, %6 : vector<16x128xf32>
    %c0_6 = arith.constant 0 : index
    %c0_7 = arith.constant 0 : index
    %8 = vector.load %arg8[%c0_6, %c0_7] : memref<16x128xf32, #tpu.memory_space<vmem>>, vector<16x128xf32>
    tpu.vector_store %arg8[%c0_6, %c0_7], %7 {strides = array<i32>} : memref<16x128xf32, #tpu.memory_space<vmem>>, vector<16x128xf32>,
    %c0_i32_8 = arith.constant 0 : i32
    %9 = arith.cmpi eq, %arg2, %c0_i32_8 : i32
    %10 = arith.extui %9 : i1 to i32
    %c0_i32_9 = arith.constant 0 : i32
    %11 = arith.cmpi ne, %10, %c0_i32_9 : i32
    scf.if %11 {
      %c0_10 = arith.constant 0 : index
      %c0_11 = arith.constant 0 : index
      %12 = vector.load %arg5[%c0_10, %c0_11] : memref<16x128xbf16, #tpu.memory_space<vmem>>, vector<16x128xbf16>
      %c0_12 = arith.constant 0 : index
      %c0_13 = arith.constant 0 : index
      %13 = vector.load %arg6[%c0_12, %c0_13] : memref<128x128xbf16, #tpu.memory_space<vmem>>, vector<128x128xbf16>
      %cst_14 = arith.constant dense<0.000000e+00> : vector<16x128xf32>
      %14 = tpu.matmul %12, %13, %cst_14 {dimension_numbers = #tpu.dot_dimension_numbers<[1], [0], [0], [1], [0, 0, 1, 1], [], []>} : vector<16x128xbf16>, vector<128x128xbf16>, vector<16x128xf32> -> vector<16x128xf32>
      %c0_15 = arith.constant 0 : index
      %c0_16 = arith.constant 0 : index
      %15 = vector.load %arg8[%c0_15, %c0_16] : memref<16x128xf32, #tpu.memory_space<vmem>>, vector<16x128xf32>
      %16 = arith.addf %15, %14 : vector<16x128xf32>
      %17 = arith.truncf %16 : vector<16x128xf32> to vector<16x128xbf16>
      %c0_17 = arith.constant 0 : index
      %c0_18 = arith.constant 0 : index
      %18 = vector.load %arg7[%c0_17, %c0_18] : memref<16x128xbf16, #tpu.memory_space<vmem>>, vector<16x128xbf16>
      tpu.vector_store %arg7[%c0_17, %c0_18], %17 {strides = array<i32>} : memref<16x128xbf16, #tpu.memory_space<vmem>>, vector<16x128xbf16>,
    } else {
    }
    return
  }
  func.func @transform_0(%arg0: i32, %arg1: i32, %arg2: i32) -> (i32, i32) {
    %c0_i32 = arith.constant 0 : i32
    return %arg0, %arg2 : i32, i32
  }
  func.func @transform_1(%arg0: i32, %arg1: i32, %arg2: i32) -> (i32, i32) {
    %c0_i32 = arith.constant 0 : i32
    return %arg2, %arg1 : i32, i32
  }
  func.func @transform_2(%arg0: i32, %arg1: i32, %arg2: i32) -> (i32, i32) {
    %c0_i32 = arith.constant 0 : i32
    %c0_i32_0 = arith.constant 0 : i32
    return %arg0, %c0_i32 : i32, i32
  }
  func.func @transform_3(%arg0: i32, %arg1: i32, %arg2: i32) -> (i32, i32) {
    %c0_i32 = arith.constant 0 : i32
    %c0_i32_0 = arith.constant 0 : i32
    return %c0_i32, %arg1 : i32, i32
  }
  func.func @transform_4(%arg0: i32, %arg1: i32, %arg2: i32) -> (i32, i32) {
    %c0_i32 = arith.constant 0 : i32
    return %arg0, %arg1 : i32, i32
  }
}

</mosaic_0001>

<llo_original>
// kernel: _qlora_apply.1
$region0: #{_qlora_apply.1}
  #allocation0 [shape = 'u32[]', space=smem, size = 0x4, offset = 0x4, fixed_abs, tag = 'smem constant byte address 0x4 - core index']
  #allocation1 [shape = 'u32[144,128]{1,0:T(1,128)}', space=vmem, size = 0x12000, scoped, tag = 'internal scratch']
  #allocation2 [shape = 'f32[16,128]{1,0:T(8,128)}', space=vmem, size = 0x2000, scoped, tag = 'scratch operand']
  %s0 = inlined_call_operand.vmem [shape: bf16[16,128], index: 0, kind: input, shape index: {}]
  %s1 = inlined_call_operand.vmem [shape: bf16[128,128], index: 1, kind: input, shape index: {}]
  %s2 = inlined_call_operand.vmem [shape: bf16[16,128], index: 2, kind: input, shape index: {}]
  %s3 = inlined_call_operand.hbm [shape: bf16[128,128], index: 3, kind: input, shape index: {}]
  %s4 = inlined_call_operand.hbm [shape: bf16[16,128], index: 4, kind: output, shape index: {}]
  %s5 = sld [smem:[#allocation0]]
  $region38: #{_qlora_apply.1} parent=0
    _
  %s7 = ssub.s32 1, %s5
  %s8 = scalar_select 0, %s7, %s5
  $region1: #{_qlora_apply.1} parent=0
    #allocation3 [shape = 'u8[32768]{0}', space=vmem, size = 0x8000, scoped, tag = 'input window, operand 3, single buffered']
    #allocation4 [shape = 's32[1]{0}', space=sflag, size = 0x4, scoped, tag = 'scoped memory for _qlora_apply.1']
    #allocation5 [shape = 's32[1]{0}', space=sflag, size = 0x4, scoped, tag = 'scoped memory for _qlora_apply.1']
    #allocation6 [shape = 'u8[4096]{0}', space=vmem, size = 0x1000, scoped, tag = 'output window, operand 0, single buffered']
    %9 = vsyncpa [#allocation4], 0
    %10 = vsyncpa [#allocation5], 0
    // Predicated region
    $region2: #{_qlora_apply.1} parent=1 // pred_check
      _
    $region3: #{_qlora_apply.1} parent=1 // pred_check_branch
      %12 = sbr.rel (0) target = $region5
    $region4: #{_qlora_apply.1} parent=1 // pred_region
      _
    $region5: #{_qlora_apply.1} parent=1 // pred_fallthru
      _
    // Predicated region
    $region6: #{_qlora_apply.1} parent=1 // pred_check
      _
    $region7: #{_qlora_apply.1} parent=1 // pred_check_branch
      %14 = sbr.rel (0) target = $region9
    $region8: #{_qlora_apply.1} parent=1 // pred_region
      _
    $region9: #{_qlora_apply.1} parent=1 // pred_fallthru
      _
    // Predicated region
    $region10: #{_qlora_apply.1} parent=1 // pred_check
      _
    $region11: #{_qlora_apply.1} parent=1 // pred_check_branch
      %16 = sbr.rel (0) target = $region13
    $region12: #{_qlora_apply.1} parent=1 // pred_region
      _
    $region13: #{_qlora_apply.1} parent=1 // pred_fallthru
      _
    // Predicated region
    $region14: #{_qlora_apply.1} parent=1 // pred_check
      _
    $region15: #{_qlora_apply.1} parent=1 // pred_check_branch
      %18 = sbr.rel (0) target = $region17
    $region16: #{_qlora_apply.1} parent=1 // pred_region
      %s20 = ssub.s32 1024, 1024
      %21 = vsyncadd [#allocation4], %s20
      %s22 = sshll.u32 [#allocation3], 4
      %s23 = int_to_ptr.vmem [resolvable:$true] %s22
      %28 = dma.hbm_to_vmem [thread:$0]  %s3, 1024, %s23, [#allocation4], 64, 64, 4
    $region17: #{_qlora_apply.1} parent=1 // pred_fallthru
      _
    // Predicated region
    $region18: #{_qlora_apply.1} parent=1 // pred_check
      _
    $region19: #{_qlora_apply.1} parent=1 // pred_check_branch
      %30 = sbr.rel (0) target = $region21
    $region20: #{_qlora_apply.1} parent=1 // pred_region
      %31 = dma.done [#allocation4], 1024
    $region21: #{_qlora_apply.1} parent=1 // pred_fallthru
      _
    %p33 = scmp.eq.s32.totalorder 0, 0
    // Predicated region
    $region22: #{_qlora_apply.1} parent=1 // pred_check
      %p34 = pneg %p33
    $region23: #{_qlora_apply.1} parent=1 // pred_check_branch
      %36 = sbr.rel (%p34) target = $region25
    $region24: #{_qlora_apply.1} parent=1 // pred_region
      %37 = vst [vmem:[#allocation2] sm:$0xff] 0.0
      %38 = vst [vmem:[#allocation2 + $0x8] sm:$0xff] 0.0
    $region25: #{_qlora_apply.1} parent=1 // pred_fallthru
      _
    %v39 = vld [vmem:[#allocation2] sm:$0xff]
    %v40 = vld [vmem:[#allocation2 + $0x8] sm:$0xff]
    %v41 = vld [vmem:[%s0] sm:$0xf]
    %v42 = vld [vmem:[%s0 + $0x4] sm:$0xf]
    %v43 = vld [vmem:[%s1] sm:$0xf]
    %v44 = vld [vmem:[%s1 + $0x4] sm:$0xf]
    %v45 = vld [vmem:[%s1 + $0x8] sm:$0xf]
    %v46 = vld [vmem:[%s1 + $0xc] sm:$0xf]
    %v47 = vld [vmem:[%s1 + $0x10] sm:$0xf]
    %v48 = vld [vmem:[%s1 + $0x14] sm:$0xf]
    %v49 = vld [vmem:[%s1 + $0x18] sm:$0xf]
    %v50 = vld [vmem:[%s1 + $0x1c] sm:$0xf]
    %v51 = vld [vmem:[%s1 + $0x20] sm:$0xf]
    %v52 = vld [vmem:[%s1 + $0x24] sm:$0xf]
    %v53 = vld [vmem:[%s1 + $0x28] sm:$0xf]
    %v54 = vld [vmem:[%s1 + $0x2c] sm:$0xf]
    %v55 = vld [vmem:[%s1 + $0x30] sm:$0xf]
    %v56 = vld [vmem:[%s1 + $0x34] sm:$0xf]
    %v57 = vld [vmem:[%s1 + $0x38] sm:$0xf]
    %v58 = vld [vmem:[%s1 + $0x3c] sm:$0xf]
    %v61 = vunpack.c.l.b16 %v41
    %v62 = vunpack.c.l.b16 %v42
    %v63 = vpack.c.b16 %v62, %v61
    %v81 = vunpack.c.l.b16 %v43
    %v82 = vunpack.c.l.b16 %v44
    %v83 = vunpack.c.l.b16 %v45
    %v84 = vunpack.c.l.b16 %v46
    %v85 = vunpack.c.l.b16 %v47
    %v86 = vunpack.c.l.b16 %v48
    %v87 = vunpack.c.l.b16 %v49
    %v88 = vunpack.c.l.b16 %v50
    %v89 = vunpack.c.l.b16 %v51
    %v90 = vunpack.c.l.b16 %v52
    %v91 = vunpack.c.l.b16 %v53
    %v92 = vunpack.c.l.b16 %v54
    %v93 = vunpack.c.l.b16 %v55
    %v94 = vunpack.c.l.b16 %v56
    %v95 = vunpack.c.l.b16 %v57
    %v96 = vunpack.c.l.b16 %v58
    %v97 = vpack.c.b16 %v82, %v81
    %v98 = vpack.c.b16 %v84, %v83
    %v99 = vpack.c.b16 %v86, %v85
    %v100 = vpack.c.b16 %v88, %v87
    %v101 = vpack.c.b16 %v90, %v89
    %v102 = vpack.c.b16 %v92, %v91
    %v103 = vpack.c.b16 %v94, %v93
    %v104 = vpack.c.b16 %v96, %v95
    %113 = vmatprep.subr.bf16.mxu0 0
    %114 = vmatpush1.bf16.msra.mxu0 %v104
    %115 = vmatprep.subr.bf16.mxu0 0
    %116 = vmatpush1.bf16.msra.mxu0 %v103
    %117 = vmatprep.subr.bf16.mxu0 0
    %118 = vmatpush1.bf16.msra.mxu0 %v102
    %119 = vmatprep.subr.bf16.mxu0 0
    %120 = vmatpush1.bf16.msra.mxu0 %v101
    %121 = vmatprep.subr.bf16.mxu0 0
    %122 = vmatpush1.bf16.msra.mxu0 %v100
    %123 = vmatprep.subr.bf16.mxu0 0
    %124 = vmatpush1.bf16.msra.mxu0 %v99
    %125 = vmatprep.subr.bf16.mxu0 0
    %126 = vmatpush1.bf16.msra.mxu0 %v98
    %127 = vmatprep.subr.bf16.mxu0 0
    %128 = vmatpush1.bf16.msra.mxu0 %v97
    %129 = vmatprep.subr.bf16.mxu0 0
    %130 = vmatpush2.bf16.msra.mxu0 0
    %131 = vmatprep.subr.bf16.mxu0 0
    %132 = vmatpush2.bf16.msra.mxu0 0
    %133 = vmatprep.subr.bf16.mxu0 0
    %134 = vmatpush2.bf16.msra.mxu0 0
    %135 = vmatprep.subr.bf16.mxu0 0
    %136 = vmatpush2.bf16.msra.mxu0 0
    %137 = vmatprep.subr.bf16.mxu0 0
    %138 = vmatpush2.bf16.msra.mxu0 0
    %139 = vmatprep.subr.bf16.mxu0 0
    %140 = vmatpush2.bf16.msra.mxu0 0
    %141 = vmatprep.subr.bf16.mxu0 0
    %142 = vmatpush2.bf16.msra.mxu0 0
    %143 = vmatprep.subr.bf16.mxu0 0
    %144 = vmatpush2.bf16.msra.mxu0 0
    %145 = vmatprep.mubr.bf16.mxu0 0
    %146 = vmatmul.mubr.bf16.gmra.mxu0 %v63
    %v147 = vpop.f32.mrf.mxu0
    %v148 = vadd.f32 0.0, %v147
    %v149 = vpop.f32.mrf.mxu0
    %v150 = vpop.f32.mrf.mxu0
    %v151 = vadd.f32 0.0, %v150
    %v152 = vpop.f32.mrf.mxu0
    %153 = vdwg.mxu0
    %v154 = vadd.f32 %v39, %v148
    %v155 = vadd.f32 %v40, %v151
    %156 = vst [vmem:[#allocation2] sm:$0xff] %v154
    %157 = vst [vmem:[#allocation2 + $0x8] sm:$0xff] %v155
    // Predicated region
    $region26: #{_qlora_apply.1} parent=1 // pred_check
      %p158 = pneg %p33
    $region27: #{_qlora_apply.1} parent=1 // pred_check_branch
      %160 = sbr.rel (%p158) target = $region29
    $region28: #{_qlora_apply.1} parent=1 // pred_region
      %v161 = vld [vmem:[%s2] sm:$0xf]
      %v162 = vld [vmem:[%s2 + $0x4] sm:$0xf]
      %v163 = vld [vmem:[#allocation3] sm:$0xf]
      %v164 = vld [vmem:[#allocation3 + $0x4] sm:$0xf]
      %v165 = vld [vmem:[#allocation3 + $0x8] sm:$0xf]
      %v166 = vld [vmem:[#allocation3 + $0xc] sm:$0xf]
      %v167 = vld [vmem:[#allocation3 + $0x10] sm:$0xf]
      %v168 = vld [vmem:[#allocation3 + $0x14] sm:$0xf]
      %v169 = vld [vmem:[#allocation3 + $0x18] sm:$0xf]
      %v170 = vld [vmem:[#allocation3 + $0x1c] sm:$0xf]
      %v171 = vld [vmem:[#allocation3 + $0x20] sm:$0xf]
      %v172 = vld [vmem:[#allocation3 + $0x24] sm:$0xf]
      %v173 = vld [vmem:[#allocation3 + $0x28] sm:$0xf]
      %v174 = vld [vmem:[#allocation3 + $0x2c] sm:$0xf]
      %v175 = vld [vmem:[#allocation3 + $0x30] sm:$0xf]
      %v176 = vld [vmem:[#allocation3 + $0x34] sm:$0xf]
      %v177 = vld [vmem:[#allocation3 + $0x38] sm:$0xf]
      %v178 = vld [vmem:[#allocation3 + $0x3c] sm:$0xf]
      %v181 = vunpack.c.l.b16 %v161
      %v182 = vunpack.c.l.b16 %v162
      %v183 = vpack.c.b16 %v182, %v181
      %v201 = vunpack.c.l.b16 %v163
      %v202 = vunpack.c.l.b16 %v164
      %v203 = vunpack.c.l.b16 %v165
      %v204 = vunpack.c.l.b16 %v166
      %v205 = vunpack.c.l.b16 %v167
      %v206 = vunpack.c.l.b16 %v168
      %v207 = vunpack.c.l.b16 %v169
      %v208 = vunpack.c.l.b16 %v170
      %v209 = vunpack.c.l.b16 %v171
      %v210 = vunpack.c.l.b16 %v172
      %v211 = vunpack.c.l.b16 %v173
      %v212 = vunpack.c.l.b16 %v174
      %v213 = vunpack.c.l.b16 %v175
      %v214 = vunpack.c.l.b16 %v176
      %v215 = vunpack.c.l.b16 %v177
      %v216 = vunpack.c.l.b16 %v178
      %v217 = vpack.c.b16 %v202, %v201
      %v218 = vpack.c.b16 %v204, %v203
      %v219 = vpack.c.b16 %v206, %v205
      %v220 = vpack.c.b16 %v208, %v207
      %v221 = vpack.c.b16 %v210, %v209
      %v222 = vpack.c.b16 %v212, %v211
      %v223 = vpack.c.b16 %v214, %v213
      %v224 = vpack.c.b16 %v216, %v215
      %233 = vmatprep.subr.bf16.mxu0 0
      %234 = vmatpush1.bf16.msra.mxu0 %v224
      %235 = vmatprep.subr.bf16.mxu0 0
      %236 = vmatpush1.bf16.msra.mxu0 %v223
      %237 = vmatprep.subr.bf16.mxu0 0
      %238 = vmatpush1.bf16.msra.mxu0 %v222
      %239 = vmatprep.subr.bf16.mxu0 0
      %240 = vmatpush1.bf16.msra.mxu0 %v221
      %241 = vmatprep.subr.bf16.mxu0 0
      %242 = vmatpush1.bf16.msra.mxu0 %v220
      %243 = vmatprep.subr.bf16.mxu0 0
      %244 = vmatpush1.bf16.msra.mxu0 %v219
      %245 = vmatprep.subr.bf16.mxu0 0
      %246 = vmatpush1.bf16.msra.mxu0 %v218
      %247 = vmatprep.subr.bf16.mxu0 0
      %248 = vmatpush1.bf16.msra.mxu0 %v217
      %249 = vmatprep.subr.bf16.mxu0 0
      %250 = vmatpush2.bf16.msra.mxu0 0
      %251 = vmatprep.subr.bf16.mxu0 0
      %252 = vmatpush2.bf16.msra.mxu0 0
      %253 = vmatprep.subr.bf16.mxu0 0
      %254 = vmatpush2.bf16.msra.mxu0 0
      %255 = vmatprep.subr.bf16.mxu0 0
      %256 = vmatpush2.bf16.msra.mxu0 0
      %257 = vmatprep.subr.bf16.mxu0 0
      %258 = vmatpush2.bf16.msra.mxu0 0
      %259 = vmatprep.subr.bf16.mxu0 0
      %260 = vmatpush2.bf16.msra.mxu0 0
      %261 = vmatprep.subr.bf16.mxu0 0
      %262 = vmatpush2.bf16.msra.mxu0 0
      %263 = vmatprep.subr.bf16.mxu0 0
      %264 = vmatpush2.bf16.msra.mxu0 0
      %265 = vmatprep.mubr.bf16.mxu0 0
      %266 = vmatmul.mubr.bf16.gmra.mxu0 %v183
      %v267 = vpop.f32.mrf.mxu0
      %v268 = vadd.f32 0.0, %v267
      %v269 = vpop.f32.mrf.mxu0
      %v270 = vpop.f32.mrf.mxu0
      %v271 = vadd.f32 0.0, %v270
      %v272 = vpop.f32.mrf.mxu0
      %273 = vdwg.mxu0
      %v274 = vld [vmem:[#allocation2] sm:$0xff]
      %v275 = vld [vmem:[#allocation2 + $0x8] sm:$0xff]
      %v276 = vadd.f32 %v274, %v268
      %v277 = vadd.f32 %v275, %v271
      %v278 = vpack.c.bf16 %v277, %v276
      %v280 = vunpack.c.l.b16 %v278
      %v281 = vunpack.c.h.b16 %v278
      %v282 = vpack.c.b16 %v280, %v280
      %v283 = vpack.c.b16 %v281, %v281
      %286 = vst [vmem:[#allocation6] sm:$0xf] %v282
      %287 = vst [vmem:[#allocation6 + $0x4] sm:$0xf] %v283
    $region29: #{_qlora_apply.1} parent=1 // pred_fallthru
      _
    // Predicated region
    $region30: #{_qlora_apply.1} parent=1 // pred_check
      _
    $region31: #{_qlora_apply.1} parent=1 // pred_check_branch
      %289 = sbr.rel (0) target = $region33
    $region32: #{_qlora_apply.1} parent=1 // pred_region
      %s291 = ssub.s32 128, 128
      %292 = vsyncadd [#allocation5], %s291
      %s293 = sshll.u32 [#allocation6], 4
      %s294 = int_to_ptr.vmem [resolvable:$true] %s293
      %299 = dma.vmem_to_hbm [thread:$0]  %s294, 128, %s4, [#allocation5], 64, 64, 4
    $region33: #{_qlora_apply.1} parent=1 // pred_fallthru
      _
    // Predicated region
    $region34: #{_qlora_apply.1} parent=1 // pred_check
      _
    $region35: #{_qlora_apply.1} parent=1 // pred_check_branch
      %301 = sbr.rel (0) target = $region37
    $region36: #{_qlora_apply.1} parent=1 // pred_region
      %302 = dma.done [#allocation5], 128
    $region37: #{_qlora_apply.1} parent=1 // pred_fallthru
      _
    %303 = vsyncpa [#allocation4], 1
    %304 = vsyncpa [#allocation5], 1

</llo_original>
